<compile_context>
chip_gen: v6e
topology: v6e:2x2x1
jax: 0.10.0
libtpu: 0.0.40
codegen_flags: <defaults>
</compile_context>

<pallas_src>
import jax
import jax.numpy as jnp
from jax import lax
from jax.experimental import pallas as pl
from jax.experimental.pallas import tpu as pltpu


def _ffn_kernel(x_ref, w1_ref, b1_ref, w2_ref, b2_ref, g_ref, beta_ref, o_ref):
    x = x_ref[...].astype(jnp.float32)                        # (TM, D) f32

    # linear1 + ReLU : operands cast to the weight dtype (bf16 recommended),
    # MXU matmul with f32 accumulation; bias/ReLU stay f32.
    h = jnp.dot(x.astype(w1_ref.dtype), w1_ref[...],
                preferred_element_type=jnp.float32) + b1_ref[...]
    h = jnp.maximum(h, 0.0)                                    # (TM, F) f32

    # linear2
    t2 = jnp.dot(h.astype(w2_ref.dtype), w2_ref[...],
                 preferred_element_type=jnp.float32) + b2_ref[...]

    # residual
    y = x + t2                                                 # (TM, D) f32

    # LayerNorm over last dim (eps matches nn.LayerNorm default 1e-5).
    # Sum-based mean/var with a compile-time 1/D multiply; rsqrt on the EUP.
    inv_d = 1.0 / y.shape[-1]
    mean = jnp.sum(y, axis=-1, keepdims=True) * inv_d
    d = y - mean
    var = jnp.sum(d * d, axis=-1, keepdims=True) * inv_d
    yn = d * lax.rsqrt(var + 1e-5)

    o_ref[...] = (yn * g_ref[...] + beta_ref[...]).astype(o_ref.dtype)


def _round_up(x, m):
    return ((x + m - 1) // m) * m


def _choose_tm(n, tm_max, n_cores=2):
    """Pick the token tile: multiple of 8, <= tm_max, and such that the number
    of tiles is a small multiple of the TensorCore count (balanced tiles)."""
    tm_max = max(8, (int(tm_max) // 8) * 8)
    if n <= 8:
        return 8
    k = 1
    while _round_up(pl.cdiv(n, n_cores * k), 8) > tm_max:
        k += 1
    return max(8, _round_up(pl.cdiv(n, n_cores * k), 8))


def ffn_layer(tgt, w1, b1, w2, b2, gamma, beta, *, tm=512, out_dtype=None):
    """tgt: (S, B, D). Returns (S, B, D).

    w1: (D, F) = linear1.weight^T, w2: (F, D) = linear2.weight^T.
    Pass w1/w2 already cast to bf16 (once, outside the call path) for MXU
    efficiency; matmuls accumulate in f32 regardless of the weight dtype.
    tm: upper bound on the token tile (multiple of 8).
    """
    S, B, D = tgt.shape
    F = w1.shape[1]
    N = S * B
    x2d = tgt.reshape(N, D)                      # metadata-only reshape
    out_dtype = tgt.dtype if out_dtype is None else out_dtype

    TM = _choose_tm(N, tm)
    grid = (pl.cdiv(N, TM),)                     # boundary block clipped by Pallas

    in_bytes = jnp.dtype(tgt.dtype).itemsize
    o_bytes = jnp.dtype(out_dtype).itemsize
    w_bytes = jnp.dtype(w1.dtype).itemsize

    # VMEM estimate: activation/output tiles double-buffered, resident
    # operands single-buffered (Buffered(1)), plus f32 intermediates.
    vmem_est = (
        2 * TM * D * in_bytes          # x tile, double-buffered
        + 2 * TM * D * o_bytes         # out tile, double-buffered
        + (D * F + F * D) * w_bytes    # weights, single-buffered
        + (F + 3 * D) * 4              # biases / LayerNorm affine
        + TM * F * 4                   # ReLU intermediate (f32)
        + 2 * TM * D * 4               # f32 temporaries (residual / normed)
    )
    # Generation-aware VMEM ceiling (v7x: 64 MiB/TC; v5e/v6e: 128 MiB).
    try:
        vmem_cap = int(pltpu.get_tpu_info().vmem_capacity_bytes)
    except Exception:
        vmem_cap = 64 * 1024 * 1024
    vmem_ceiling = max(vmem_cap - 16 * 1024 * 1024, 32 * 1024 * 1024)
    vmem_limit = int(min(max(2 * vmem_est, 16 * 1024 * 1024), vmem_ceiling))

    cost = pl.CostEstimate(
        flops=4 * N * D * F,                               # two matmuls
        transcendentals=N,                                  # rsqrt per row
        bytes_accessed=(N * D * (in_bytes + o_bytes)
                        + (D * F + F * D) * w_bytes
                        + 4 * (F + 3 * D)),
    )

    def _specs(single_buffer_residents):
        def resident(shape):
            index_map = lambda i: (0,) * len(shape)
            if single_buffer_residents:
                # Constant index_map -> no re-DMA; Buffered(1) also drops the
                # second (unused) VMEM buffer for these operands.
                return pl.BlockSpec(shape, index_map,
                                    pipeline_mode=pl.Buffered(1))
            return pl.BlockSpec(shape, index_map)
        return [
            pl.BlockSpec((TM, D), lambda i: (i, 0)),   # activations: tiled
            resident((D, F)),                          # w1: VMEM-resident
            resident((1, F)),                          # b1
            resident((F, D)),                          # w2: VMEM-resident
            resident((1, D)),                          # b2
            resident((1, D)),                          # gamma
            resident((1, D)),                          # beta
        ]

    def _run(single_buffer_residents):
        return pl.pallas_call(
            _ffn_kernel,
            out_shape=jax.ShapeDtypeStruct((N, D), out_dtype),
            grid=grid,
            in_specs=_specs(single_buffer_residents),
            out_specs=pl.BlockSpec((TM, D), lambda i: (i, 0)),
            compiler_params=pltpu.CompilerParams(
                # Rows are independent -> megacore sharding of the token axis.
                # TODO(synk): on v7x, verify both TCs are active; if not, switch
                # this axis to pltpu.CORE_PARALLEL (tile count is already even).
                dimension_semantics=("parallel",),
                vmem_limit_bytes=vmem_limit,
            ),
            cost_estimate=cost,
        )(x2d, w1, b1.reshape(1, F), w2, b2.reshape(1, D),
          gamma.reshape(1, D), beta.reshape(1, D))

    try:
        out2d = _run(True)
    except Exception:
        # pipeline_mode=pl.Buffered(1) unsupported on this jax version:
        # fall back to default double-buffering of the resident operands.
        out2d = _run(False)

    return out2d.reshape(S, B, D)


def _xavier_uniform(key, fan_in, fan_out, dtype=jnp.float32):
    # Matches nn.init.xavier_uniform_ (gain=1): U(-a, a), a = sqrt(6/(fan_in+fan_out))
    a = (6.0 / (fan_in + fan_out)) ** 0.5
    return jax.random.uniform(key, (fan_in, fan_out), dtype, minval=-a, maxval=a)


if __name__ == "__main__":
    # Small, FFN-consistent shapes: seq=8, batch=2, d_model=32, dim_feedforward=64.
    # tm=8 so the toy run exercises the tiled / pipelined path (grid=(2,)).
    S, B, D, FF = 8, 2, 32, 64

    key = jax.random.PRNGKey(0)
    k_x, k_w1, k_w2 = jax.random.split(key, 3)

    tgt = jax.random.normal(k_x, (S, B, D), jnp.float32)

    # Parameters (xavier_uniform for matrices, zeros for biases, ones/zeros for
    # LayerNorm — mirrors FFNLayer._reset_parameters with dropout=0.0).
    w1 = _xavier_uniform(k_w1, D, FF)          # linear1.weight^T, laid out (in, out)
    b1 = jnp.zeros((FF,), jnp.float32)
    w2 = _xavier_uniform(k_w2, FF, D)          # linear2.weight^T
    b2 = jnp.zeros((D,), jnp.float32)
    gamma = jnp.ones((D,), jnp.float32)
    beta = jnp.zeros((D,), jnp.float32)

    # bf16 weight casts hoisted out of the per-call path (cast once here,
    # reused for every invocation).
    w1_bf = jax.block_until_ready(w1.astype(jnp.bfloat16))
    w2_bf = jax.block_until_ready(w2.astype(jnp.bfloat16))

    out = ffn_layer(tgt, w1_bf, b1, w2_bf, b2, gamma, beta, tm=8)
    out = jax.block_until_ready(out)

    # Pure-JAX f32 reference (forward_post semantics). Kernel runs the matmuls
    # in bf16 with f32 accumulation, so compare with a bf16-appropriate tolerance.
    def ref(x):
        h = jnp.maximum(x @ w1 + b1, 0.0)
        t2 = h @ w2 + b2
        y = x + t2
        m = jnp.mean(y, axis=-1, keepdims=True)
        v = jnp.mean((y - m) ** 2, axis=-1, keepdims=True)
        return (y - m) / jnp.sqrt(v + 1e-5) * gamma + beta

    assert out.shape == (S, B, D)
    assert bool(jnp.all(jnp.isfinite(out)))
    assert jnp.allclose(out, ref(tgt), atol=3e-2, rtol=3e-2)
    print("KERNEL_OK")
</pallas_src>

<mosaic_0001>
module attributes {stable_mosaic.version = 11 : i64} {
  func.func @_ffn_kernel(%arg0: i32, %arg1: memref<8x32xf32, #tpu.memory_space<vmem>>, %arg2: memref<32x64xbf16, #tpu.memory_space<vmem>>, %arg3: memref<1x64xf32, #tpu.memory_space<vmem>>, %arg4: memref<64x32xbf16, #tpu.memory_space<vmem>>, %arg5: memref<1x32xf32, #tpu.memory_space<vmem>>, %arg6: memref<1x32xf32, #tpu.memory_space<vmem>>, %arg7: memref<1x32xf32, #tpu.memory_space<vmem>>, %arg8: memref<8x32xf32, #tpu.memory_space<vmem>>) attributes {dimension_semantics = [#tpu.dimension_semantics<parallel>], iteration_bounds = array<i64: 2>, scalar_prefetch = 0 : i64, scratch_operands = 0 : i64, tpu.core_type = #tpu.core_type<tc>, window_params = [{transform_indices = @transform_0, window_bounds = array<i64: 8, 32>}, {pipeline_mode = #tpu.pipeline_mode<synchronous>, transform_indices = @transform_1, window_bounds = array<i64: 32, 64>}, {pipeline_mode = #tpu.pipeline_mode<synchronous>, transform_indices = @transform_2, window_bounds = array<i64: 1, 64>}, {pipeline_mode = #tpu.pipeline_mode<synchronous>, transform_indices = @transform_3, window_bounds = array<i64: 64, 32>}, {pipeline_mode = #tpu.pipeline_mode<synchronous>, transform_indices = @transform_4, window_bounds = array<i64: 1, 32>}, {pipeline_mode = #tpu.pipeline_mode<synchronous>, transform_indices = @transform_5, window_bounds = array<i64: 1, 32>}, {pipeline_mode = #tpu.pipeline_mode<synchronous>, transform_indices = @transform_6, window_bounds = array<i64: 1, 32>}, {transform_indices = @transform_7, window_bounds = array<i64: 8, 32>}]} {
    %c0 = arith.constant 0 : index
    %c0_0 = arith.constant 0 : index
    %0 = vector.load %arg1[%c0, %c0_0] : memref<8x32xf32, #tpu.memory_space<vmem>>, vector<8x32xf32>
    %1 = arith.truncf %0 : vector<8x32xf32> to vector<8x32xbf16>
    %c0_1 = arith.constant 0 : index
    %c0_2 = arith.constant 0 : index
    %2 = vector.load %arg2[%c0_1, %c0_2] : memref<32x64xbf16, #tpu.memory_space<vmem>>, vector<32x64xbf16>
    %cst = arith.constant dense<0.000000e+00> : vector<8x64xf32>
    %3 = tpu.matmul %1, %2, %cst {dimension_numbers = #tpu.dot_dimension_numbers<[1], [0], [0], [1], [0, 0, 1, 1], [], []>} : vector<8x32xbf16>, vector<32x64xbf16>, vector<8x64xf32> -> vector<8x64xf32>
    %c0_3 = arith.constant 0 : index
    %c0_4 = arith.constant 0 : index
    %4 = vector.load %arg3[%c0_3, %c0_4] : memref<1x64xf32, #tpu.memory_space<vmem>>, vector<1x64xf32>
    %5 = vector.broadcast %4 : vector<1x64xf32> to vector<8x64xf32>
    %6 = arith.addf %3, %5 : vector<8x64xf32>
    %cst_5 = arith.constant 0.000000e+00 : f32
    %7 = vector.broadcast %cst_5 : f32 to vector<8x64xf32>
    %8 = arith.maximumf %6, %7 : vector<8x64xf32>
    %9 = arith.truncf %8 : vector<8x64xf32> to vector<8x64xbf16>
    %c0_6 = arith.constant 0 : index
    %c0_7 = arith.constant 0 : index
    %10 = vector.load %arg4[%c0_6, %c0_7] : memref<64x32xbf16, #tpu.memory_space<vmem>>, vector<64x32xbf16>
    %cst_8 = arith.constant dense<0.000000e+00> : vector<8x32xf32>
    %11 = tpu.matmul %9, %10, %cst_8 {dimension_numbers = #tpu.dot_dimension_numbers<[1], [0], [0], [1], [0, 0, 1, 1], [], []>} : vector<8x64xbf16>, vector<64x32xbf16>, vector<8x32xf32> -> vector<8x32xf32>
    %c0_9 = arith.constant 0 : index
    %c0_10 = arith.constant 0 : index
    %12 = vector.load %arg5[%c0_9, %c0_10] : memref<1x32xf32, #tpu.memory_space<vmem>>, vector<1x32xf32>
    %13 = vector.broadcast %12 : vector<1x32xf32> to vector<8x32xf32>
    %14 = arith.addf %11, %13 : vector<8x32xf32>
    %15 = arith.addf %0, %14 : vector<8x32xf32>
    %cst_11 = arith.constant dense<0.000000e+00> : vector<8xf32>
    %16 = vector.multi_reduction <add>, %15, %cst_11 [1] : vector<8x32xf32> to vector<8xf32>
    %17 = vector.shape_cast %16 : vector<8xf32> to vector<8x1xf32>
    %cst_12 = arith.constant 3.125000e-02 : f32
    %18 = vector.broadcast %cst_12 : f32 to vector<8x1xf32>
    %19 = arith.mulf %17, %18 : vector<8x1xf32>
    %20 = vector.broadcast %19 : vector<8x1xf32> to vector<8x32xf32>
    %21 = arith.subf %15, %20 : vector<8x32xf32>
    %22 = arith.mulf %21, %21 : vector<8x32xf32>
    %cst_13 = arith.constant dense<0.000000e+00> : vector<8xf32>
    %23 = vector.multi_reduction <add>, %22, %cst_13 [1] : vector<8x32xf32> to vector<8xf32>
    %24 = vector.shape_cast %23 : vector<8xf32> to vector<8x1xf32>
    %cst_14 = arith.constant 3.125000e-02 : f32
    %25 = vector.broadcast %cst_14 : f32 to vector<8x1xf32>
    %26 = arith.mulf %24, %25 : vector<8x1xf32>
    %cst_15 = arith.constant 9.99999974E-6 : f32
    %27 = vector.broadcast %cst_15 : f32 to vector<8x1xf32>
    %28 = arith.addf %26, %27 : vector<8x1xf32>
    %29 = math.rsqrt %28 : vector<8x1xf32>
    %30 = vector.broadcast %29 : vector<8x1xf32> to vector<8x32xf32>
    %31 = arith.mulf %21, %30 : vector<8x32xf32>
    %c0_16 = arith.constant 0 : index
    %c0_17 = arith.constant 0 : index
    %32 = vector.load %arg6[%c0_16, %c0_17] : memref<1x32xf32, #tpu.memory_space<vmem>>, vector<1x32xf32>
    %33 = vector.broadcast %32 : vector<1x32xf32> to vector<8x32xf32>
    %34 = arith.mulf %31, %33 : vector<8x32xf32>
    %c0_18 = arith.constant 0 : index
    %c0_19 = arith.constant 0 : index
    %35 = vector.load %arg7[%c0_18, %c0_19] : memref<1x32xf32, #tpu.memory_space<vmem>>, vector<1x32xf32>
    %36 = vector.broadcast %35 : vector<1x32xf32> to vector<8x32xf32>
    %37 = arith.addf %34, %36 : vector<8x32xf32>
    %c0_20 = arith.constant 0 : index
    %c0_21 = arith.constant 0 : index
    %38 = vector.load %arg8[%c0_20, %c0_21] : memref<8x32xf32, #tpu.memory_space<vmem>>, vector<8x32xf32>
    tpu.vector_store %arg8[%c0_20, %c0_21], %37 {strides = array<i32>} : memref<8x32xf32, #tpu.memory_space<vmem>>, vector<8x32xf32>,
    return
  }
  func.func @transform_0(%arg0: i32) -> (i32, i32) {
    %c0_i32 = arith.constant 0 : i32
    %c0_i32_0 = arith.constant 0 : i32
    return %arg0, %c0_i32 : i32, i32
  }
  func.func @transform_1(%arg0: i32) -> (i32, i32) {
    %c0_i32 = arith.constant 0 : i32
    %c0_i32_0 = arith.constant 0 : i32
    %c0_i32_1 = arith.constant 0 : i32
    return %c0_i32, %c0_i32_0 : i32, i32
  }
  func.func @transform_2(%arg0: i32) -> (i32, i32) {
    %c0_i32 = arith.constant 0 : i32
    %c0_i32_0 = arith.constant 0 : i32
    %c0_i32_1 = arith.constant 0 : i32
    return %c0_i32, %c0_i32_0 : i32, i32
  }
  func.func @transform_3(%arg0: i32) -> (i32, i32) {
    %c0_i32 = arith.constant 0 : i32
    %c0_i32_0 = arith.constant 0 : i32
    %c0_i32_1 = arith.constant 0 : i32
    return %c0_i32, %c0_i32_0 : i32, i32
  }
  func.func @transform_4(%arg0: i32) -> (i32, i32) {
    %c0_i32 = arith.constant 0 : i32
    %c0_i32_0 = arith.constant 0 : i32
    %c0_i32_1 = arith.constant 0 : i32
    return %c0_i32, %c0_i32_0 : i32, i32
  }
  func.func @transform_5(%arg0: i32) -> (i32, i32) {
    %c0_i32 = arith.constant 0 : i32
    %c0_i32_0 = arith.constant 0 : i32
    %c0_i32_1 = arith.constant 0 : i32
    return %c0_i32, %c0_i32_0 : i32, i32
  }
  func.func @transform_6(%arg0: i32) -> (i32, i32) {
    %c0_i32 = arith.constant 0 : i32
    %c0_i32_0 = arith.constant 0 : i32
    %c0_i32_1 = arith.constant 0 : i32
    return %c0_i32, %c0_i32_0 : i32, i32
  }
  func.func @transform_7(%arg0: i32) -> (i32, i32) {
    %c0_i32 = arith.constant 0 : i32
    %c0_i32_0 = arith.constant 0 : i32
    return %arg0, %c0_i32 : i32, i32
  }
}

module attributes {stable_mosaic.version = 11 : i64} {
  func.func @_ffn_kernel(%arg0: i32, %arg1: memref<8x32xf32, #tpu.memory_space<vmem>>, %arg2: memref<32x64xbf16, #tpu.memory_space<vmem>>, %arg3: memref<1x64xf32, #tpu.memory_space<vmem>>, %arg4: memref<64x32xbf16, #tpu.memory_space<vmem>>, %arg5: memref<1x32xf32, #tpu.memory_space<vmem>>, %arg6: memref<1x32xf32, #tpu.memory_space<vmem>>, %arg7: memref<1x32xf32, #tpu.memory_space<vmem>>, %arg8: memref<8x32xf32, #tpu.memory_space<vmem>>) attributes {dimension_semantics = [#tpu.dimension_semantics<parallel>], iteration_bounds = array<i64: 2>, scalar_prefetch = 0 : i64, scratch_operands = 0 : i64, tpu.core_type = #tpu.core_type<tc>, window_params = [{transform_indices = @transform_0, window_bounds = array<i64: 8, 32>}, {pipeline_mode = #tpu.pipeline_mode<synchronous>, transform_indices = @transform_1, window_bounds = array<i64: 32, 64>}, {pipeline_mode = #tpu.pipeline_mode<synchronous>, transform_indices = @transform_2, window_bounds = array<i64: 1, 64>}, {pipeline_mode = #tpu.pipeline_mode<synchronous>, transform_indices = @transform_3, window_bounds = array<i64: 64, 32>}, {pipeline_mode = #tpu.pipeline_mode<synchronous>, transform_indices = @transform_4, window_bounds = array<i64: 1, 32>}, {pipeline_mode = #tpu.pipeline_mode<synchronous>, transform_indices = @transform_5, window_bounds = array<i64: 1, 32>}, {pipeline_mode = #tpu.pipeline_mode<synchronous>, transform_indices = @transform_6, window_bounds = array<i64: 1, 32>}, {transform_indices = @transform_7, window_bounds = array<i64: 8, 32>}]} {
    %c0 = arith.constant 0 : index
    %c0_0 = arith.constant 0 : index
    %0 = vector.load %arg1[%c0, %c0_0] : memref<8x32xf32, #tpu.memory_space<vmem>>, vector<8x32xf32>
    %1 = arith.truncf %0 : vector<8x32xf32> to vector<8x32xbf16>
    %c0_1 = arith.constant 0 : index
    %c0_2 = arith.constant 0 : index
    %2 = vector.load %arg2[%c0_1, %c0_2] : memref<32x64xbf16, #tpu.memory_space<vmem>>, vector<32x64xbf16>
    %cst = arith.constant dense<0.000000e+00> : vector<8x64xf32>
    %3 = tpu.matmul %1, %2, %cst {dimension_numbers = #tpu.dot_dimension_numbers<[1], [0], [0], [1], [0, 0, 1, 1], [], []>} : vector<8x32xbf16>, vector<32x64xbf16>, vector<8x64xf32> -> vector<8x64xf32>
    %c0_3 = arith.constant 0 : index
    %c0_4 = arith.constant 0 : index
    %4 = vector.load %arg3[%c0_3, %c0_4] : memref<1x64xf32, #tpu.memory_space<vmem>>, vector<1x64xf32>
    %5 = vector.broadcast %4 : vector<1x64xf32> to vector<8x64xf32>
    %6 = arith.addf %3, %5 : vector<8x64xf32>
    %cst_5 = arith.constant 0.000000e+00 : f32
    %7 = vector.broadcast %cst_5 : f32 to vector<8x64xf32>
    %8 = arith.maximumf %6, %7 : vector<8x64xf32>
    %9 = arith.truncf %8 : vector<8x64xf32> to vector<8x64xbf16>
    %c0_6 = arith.constant 0 : index
    %c0_7 = arith.constant 0 : index
    %10 = vector.load %arg4[%c0_6, %c0_7] : memref<64x32xbf16, #tpu.memory_space<vmem>>, vector<64x32xbf16>
    %cst_8 = arith.constant dense<0.000000e+00> : vector<8x32xf32>
    %11 = tpu.matmul %9, %10, %cst_8 {dimension_numbers = #tpu.dot_dimension_numbers<[1], [0], [0], [1], [0, 0, 1, 1], [], []>} : vector<8x64xbf16>, vector<64x32xbf16>, vector<8x32xf32> -> vector<8x32xf32>
    %c0_9 = arith.constant 0 : index
    %c0_10 = arith.constant 0 : index
    %12 = vector.load %arg5[%c0_9, %c0_10] : memref<1x32xf32, #tpu.memory_space<vmem>>, vector<1x32xf32>
    %13 = vector.broadcast %12 : vector<1x32xf32> to vector<8x32xf32>
    %14 = arith.addf %11, %13 : vector<8x32xf32>
    %15 = arith.addf %0, %14 : vector<8x32xf32>
    %cst_11 = arith.constant dense<0.000000e+00> : vector<8xf32>
    %16 = vector.multi_reduction <add>, %15, %cst_11 [1] : vector<8x32xf32> to vector<8xf32>
    %17 = vector.shape_cast %16 : vector<8xf32> to vector<8x1xf32>
    %cst_12 = arith.constant 3.125000e-02 : f32
    %18 = vector.broadcast %cst_12 : f32 to vector<8x1xf32>
    %19 = arith.mulf %17, %18 : vector<8x1xf32>
    %20 = vector.broadcast %19 : vector<8x1xf32> to vector<8x32xf32>
    %21 = arith.subf %15, %20 : vector<8x32xf32>
    %22 = arith.mulf %21, %21 : vector<8x32xf32>
    %cst_13 = arith.constant dense<0.000000e+00> : vector<8xf32>
    %23 = vector.multi_reduction <add>, %22, %cst_13 [1] : vector<8x32xf32> to vector<8xf32>
    %24 = vector.shape_cast %23 : vector<8xf32> to vector<8x1xf32>
    %cst_14 = arith.constant 3.125000e-02 : f32
    %25 = vector.broadcast %cst_14 : f32 to vector<8x1xf32>
    %26 = arith.mulf %24, %25 : vector<8x1xf32>
    %cst_15 = arith.constant 9.99999974E-6 : f32
    %27 = vector.broadcast %cst_15 : f32 to vector<8x1xf32>
    %28 = arith.addf %26, %27 : vector<8x1xf32>
    %29 = math.rsqrt %28 : vector<8x1xf32>
    %30 = vector.broadcast %29 : vector<8x1xf32> to vector<8x32xf32>
    %31 = arith.mulf %21, %30 : vector<8x32xf32>
    %c0_16 = arith.constant 0 : index
    %c0_17 = arith.constant 0 : index
    %32 = vector.load %arg6[%c0_16, %c0_17] : memref<1x32xf32, #tpu.memory_space<vmem>>, vector<1x32xf32>
    %33 = vector.broadcast %32 : vector<1x32xf32> to vector<8x32xf32>
    %34 = arith.mulf %31, %33 : vector<8x32xf32>
    %c0_18 = arith.constant 0 : index
    %c0_19 = arith.constant 0 : index
    %35 = vector.load %arg7[%c0_18, %c0_19] : memref<1x32xf32, #tpu.memory_space<vmem>>, vector<1x32xf32>
    %36 = vector.broadcast %35 : vector<1x32xf32> to vector<8x32xf32>
    %37 = arith.addf %34, %36 : vector<8x32xf32>
    %c0_20 = arith.constant 0 : index
    %c0_21 = arith.constant 0 : index
    %38 = vector.load %arg8[%c0_20, %c0_21] : memref<8x32xf32, #tpu.memory_space<vmem>>, vector<8x32xf32>
    tpu.vector_store %arg8[%c0_20, %c0_21], %37 {strides = array<i32>} : memref<8x32xf32, #tpu.memory_space<vmem>>, vector<8x32xf32>,
    return
  }
  func.func @transform_0(%arg0: i32) -> (i32, i32) {
    %c0_i32 = arith.constant 0 : i32
    %c0_i32_0 = arith.constant 0 : i32
    return %arg0, %c0_i32 : i32, i32
  }
  func.func @transform_1(%arg0: i32) -> (i32, i32) {
    %c0_i32 = arith.constant 0 : i32
    %c0_i32_0 = arith.constant 0 : i32
    %c0_i32_1 = arith.constant 0 : i32
    return %c0_i32, %c0_i32_0 : i32, i32
  }
  func.func @transform_2(%arg0: i32) -> (i32, i32) {
    %c0_i32 = arith.constant 0 : i32
    %c0_i32_0 = arith.constant 0 : i32
    %c0_i32_1 = arith.constant 0 : i32
    return %c0_i32, %c0_i32_0 : i32, i32
  }
  func.func @transform_3(%arg0: i32) -> (i32, i32) {
    %c0_i32 = arith.constant 0 : i32
    %c0_i32_0 = arith.constant 0 : i32
    %c0_i32_1 = arith.constant 0 : i32
    return %c0_i32, %c0_i32_0 : i32, i32
  }
  func.func @transform_4(%arg0: i32) -> (i32, i32) {
    %c0_i32 = arith.constant 0 : i32
    %c0_i32_0 = arith.constant 0 : i32
    %c0_i32_1 = arith.constant 0 : i32
    return %c0_i32, %c0_i32_0 : i32, i32
  }
  func.func @transform_5(%arg0: i32) -> (i32, i32) {
    %c0_i32 = arith.constant 0 : i32
    %c0_i32_0 = arith.constant 0 : i32
    %c0_i32_1 = arith.constant 0 : i32
    return %c0_i32, %c0_i32_0 : i32, i32
  }
  func.func @transform_6(%arg0: i32) -> (i32, i32) {
    %c0_i32 = arith.constant 0 : i32
    %c0_i32_0 = arith.constant 0 : i32
    %c0_i32_1 = arith.constant 0 : i32
    return %c0_i32, %c0_i32_0 : i32, i32
  }
  func.func @transform_7(%arg0: i32) -> (i32, i32) {
    %c0_i32 = arith.constant 0 : i32
    %c0_i32_0 = arith.constant 0 : i32
    return %arg0, %c0_i32 : i32, i32
  }
}

</mosaic_0001>

<llo_original>
// kernel: tpu_custom_call.1
$region0: #{tpu_custom_call.1}
  #allocation0 [shape = 'u32[]', space=smem, size = 0x4, offset = 0x4, fixed_abs, tag = 'smem constant byte address 0x4 - core index']
  #allocation1 [shape = 'u32[144,128]{1,0:T(1,128)}', space=vmem, size = 0x12000, scoped, tag = 'internal scratch']
  %s0 = inlined_call_operand.vmem [shape: f32[16,32], index: 0, kind: input, shape index: {}]
  %s1 = inlined_call_operand.vmem [shape: bf16[32,64], index: 1, kind: input, shape index: {}]
  %s2 = inlined_call_operand.vmem [shape: f32[1,64], index: 2, kind: input, shape index: {}]
  %s3 = inlined_call_operand.vmem [shape: bf16[64,32], index: 3, kind: input, shape index: {}]
  %s4 = inlined_call_operand.vmem [shape: f32[1,32], index: 4, kind: input, shape index: {}]
  %s5 = inlined_call_operand.vmem [shape: f32[1,32], index: 5, kind: input, shape index: {}]
  %s6 = inlined_call_operand.vmem [shape: f32[1,32], index: 6, kind: input, shape index: {}]
  %s7 = inlined_call_operand.hbm [shape: f32[16,32], index: 7, kind: output, shape index: {}]
  %s8 = sld [smem:[#allocation0]]
  $region61: #{tpu_custom_call.1} parent=0
    _
  %s10 = ssub.s32 1, %s8
  %s11 = scalar_select 0, %s10, %s8
  $region1: #{tpu_custom_call.1} parent=0
    #allocation2 [shape = 'u8[8192]{0}', space=vmem, size = 0x2000, scoped, tag = 'output window, operand 0']
    #allocation3 [shape = 's32[2]{0}', space=sflag, size = 0x8, scoped, tag = 'scoped memory for tpu_custom_call.1']
    %12 = vsyncpa [#allocation3], 0
    %s13 = scalar_lea.sflag [#allocation3], 1
    %14 = vsyncpa %s13, 0
    loop: start=0, step=1, limit=4
    $region2: #{tpu_custom_call.1} parent=1 // loop_pre_header
      _
    $region3: #{tpu_custom_call.1} parent=1 // loop_header
      %s16 = sphi 0, %s20
      %p17 = scmp.ge.s32.totalorder %s16, 4
      %s26 = sphi 0, %s28
      %s29 = sphi 0, %s26
      %s30 = sphi 0, %s29
      %s46 = sphi 0, %s30
      %s50 = sphi 0, %s50
      %s52 = sphi 0, %s50
      %s53 = sphi 0, %s52
      %s67 = sphi 0, %s53
      %s71 = sphi 0, %s71
      %s73 = sphi 0, %s71
      %s74 = sphi 0, %s73
      %s88 = sphi 0, %s74
      %s92 = sphi 0, %s92
      %s94 = sphi 0, %s92
      %s95 = sphi 0, %s94
      %s109 = sphi 0, %s95
      %s113 = sphi 0, %s113
      %s115 = sphi 0, %s113
      %s116 = sphi 0, %s115
      %s130 = sphi 0, %s116
      %s134 = sphi 0, %s134
      %s136 = sphi 0, %s134
      %s137 = sphi 0, %s136
      %s151 = sphi 0, %s137
      %s155 = sphi 0, %s155
      %s157 = sphi 0, %s155
      %s158 = sphi 0, %s157
      %s172 = sphi 0, %s158
      %s178 = sphi 0, %s180
      %s181 = sphi 0, %s178
      %s182 = sphi 0, %s181
      %s198 = sphi 0, %s182
    $region4: #{tpu_custom_call.1} parent=1 // loop_header_branch
      %19 = sbr.rel (%p17) target = $region8
    $region5: #{tpu_custom_call.1} parent=1 // loop_body
      %s21 = ssub.s32 %s16, 1
      %s22 = ssub.s32 %s16, 2
      %s23 = sadd.s32 %s16, 1
      %s24 = ssub.s32 %s16, %s23
      %p25 = scmp.eq.s32.totalorder %s24, 0
      %s27 = sadd.s32 %s26, 1
      %s28 = scalar_select %p25, %s26, %s27
      %p31 = pneg %p25
      %p32 = scmp.eq.s32.totalorder %s16, 1
      %p33 = por %p31, %p32
      %p34 = scmp.ne.s32.totalorder %s26, %s29
      %p35 = scmp.eq.s32.totalorder %s16, 0
      %p36 = por %p34, %p35
      %p37 = scmp.ne.s32.totalorder %s26, %s29
      %p38 = scmp.eq.s32.totalorder %s21, 1
      %p39 = por %p37, %p38
      %p40 = scmp.ne.s32.totalorder %s29, %s30
      %p41 = scmp.eq.s32.totalorder %s21, 0
      %p42 = por %p40, %p41
      %p43 = scmp.ne.s32.totalorder %s29, %s30
      %p44 = scmp.eq.s32.totalorder %s22, 1
      %p45 = por %p43, %p44
      %p47 = scmp.ne.s32.totalorder %s30, %s46
      %p48 = scmp.eq.s32.totalorder %s22, 0
      %p49 = por %p47, %p48
      %s51 = sadd.s32 %s50, 1
      %p54 = scmp.eq.s32.totalorder %s16, 1
      %p55 = scmp.ne.s32.totalorder %s50, %s52
      %p56 = scmp.eq.s32.totalorder %s16, 0
      %p57 = por %p55, %p56
      %p58 = scmp.ne.s32.totalorder %s50, %s52
      %p59 = scmp.eq.s32.totalorder %s21, 1
      %p60 = por %p58, %p59
      %p61 = scmp.ne.s32.totalorder %s52, %s53
      %p62 = scmp.eq.s32.totalorder %s21, 0
      %p63 = por %p61, %p62
      %p64 = scmp.ne.s32.totalorder %s52, %s53
      %p65 = scmp.eq.s32.totalorder %s22, 1
      %p66 = por %p64, %p65
      %p68 = scmp.ne.s32.totalorder %s53, %s67
      %p69 = scmp.eq.s32.totalorder %s22, 0
      %p70 = por %p68, %p69
      %s72 = sadd.s32 %s71, 1
      %p75 = scmp.eq.s32.totalorder %s16, 1
      %p76 = scmp.ne.s32.totalorder %s71, %s73
      %p77 = scmp.eq.s32.totalorder %s16, 0
      %p78 = por %p76, %p77
      %p79 = scmp.ne.s32.totalorder %s71, %s73
      %p80 = scmp.eq.s32.totalorder %s21, 1
      %p81 = por %p79, %p80
      %p82 = scmp.ne.s32.totalorder %s73, %s74
      %p83 = scmp.eq.s32.totalorder %s21, 0
      %p84 = por %p82, %p83
      %p85 = scmp.ne.s32.totalorder %s73, %s74
      %p86 = scmp.eq.s32.totalorder %s22, 1
      %p87 = por %p85, %p86
      %p89 = scmp.ne.s32.totalorder %s74, %s88
      %p90 = scmp.eq.s32.totalorder %s22, 0
      %p91 = por %p89, %p90
      %s93 = sadd.s32 %s92, 1
      %p96 = scmp.eq.s32.totalorder %s16, 1
      %p97 = scmp.ne.s32.totalorder %s92, %s94
      %p98 = scmp.eq.s32.totalorder %s16, 0
      %p99 = por %p97, %p98
      %p100 = scmp.ne.s32.totalorder %s92, %s94
      %p101 = scmp.eq.s32.totalorder %s21, 1
      %p102 = por %p100, %p101
      %p103 = scmp.ne.s32.totalorder %s94, %s95
      %p104 = scmp.eq.s32.totalorder %s21, 0
      %p105 = por %p103, %p104
      %p106 = scmp.ne.s32.totalorder %s94, %s95
      %p107 = scmp.eq.s32.totalorder %s22, 1
      %p108 = por %p106, %p107
      %p110 = scmp.ne.s32.totalorder %s95, %s109
      %p111 = scmp.eq.s32.totalorder %s22, 0
      %p112 = por %p110, %p111
      %s114 = sadd.s32 %s113, 1
      %p117 = scmp.eq.s32.totalorder %s16, 1
      %p118 = scmp.ne.s32.totalorder %s113, %s115
      %p119 = scmp.eq.s32.totalorder %s16, 0
      %p120 = por %p118, %p119
      %p121 = scmp.ne.s32.totalorder %s113, %s115
      %p122 = scmp.eq.s32.totalorder %s21, 1
      %p123 = por %p121, %p122
      %p124 = scmp.ne.s32.totalorder %s115, %s116
      %p125 = scmp.eq.s32.totalorder %s21, 0
      %p126 = por %p124, %p125
      %p127 = scmp.ne.s32.totalorder %s115, %s116
      %p128 = scmp.eq.s32.totalorder %s22, 1
      %p129 = por %p127, %p128
      %p131 = scmp.ne.s32.totalorder %s116, %s130
      %p132 = scmp.eq.s32.totalorder %s22, 0
      %p133 = por %p131, %p132
      %s135 = sadd.s32 %s134, 1
      %p138 = scmp.eq.s32.totalorder %s16, 1
      %p139 = scmp.ne.s32.totalorder %s134, %s136
      %p140 = scmp.eq.s32.totalorder %s16, 0
      %p141 = por %p139, %p140
      %p142 = scmp.ne.s32.totalorder %s134, %s136
      %p143 = scmp.eq.s32.totalorder %s21, 1
      %p144 = por %p142, %p143
      %p145 = scmp.ne.s32.totalorder %s136, %s137
      %p146 = scmp.eq.s32.totalorder %s21, 0
      %p147 = por %p145, %p146
      %p148 = scmp.ne.s32.totalorder %s136, %s137
      %p149 = scmp.eq.s32.totalorder %s22, 1
      %p150 = por %p148, %p149
      %p152 = scmp.ne.s32.totalorder %s137, %s151
      %p153 = scmp.eq.s32.totalorder %s22, 0
      %p154 = por %p152, %p153
      %s156 = sadd.s32 %s155, 1
      %p159 = scmp.eq.s32.totalorder %s16, 1
      %p160 = scmp.ne.s32.totalorder %s155, %s157
      %p161 = scmp.eq.s32.totalorder %s16, 0
      %p162 = por %p160, %p161
      %p163 = scmp.ne.s32.totalorder %s155, %s157
      %p164 = scmp.eq.s32.totalorder %s21, 1
      %p165 = por %p163, %p164
      %p166 = scmp.ne.s32.totalorder %s157, %s158
      %p167 = scmp.eq.s32.totalorder %s21, 0
      %p168 = por %p166, %p167
      %p169 = scmp.ne.s32.totalorder %s157, %s158
      %p170 = scmp.eq.s32.totalorder %s22, 1
      %p171 = por %p169, %p170
      %p173 = scmp.ne.s32.totalorder %s158, %s172
      %p174 = scmp.eq.s32.totalorder %s22, 0
      %p175 = por %p173, %p174
      %s176 = ssub.s32 %s16, %s23
      %p177 = scmp.eq.s32.totalorder %s176, 0
      %s179 = sadd.s32 %s178, 1
      %s180 = scalar_select %p177, %s178, %s179
      %p183 = pneg %p177
      %p184 = scmp.eq.s32.totalorder %s16, 1
      %p185 = por %p183, %p184
      %p186 = scmp.ne.s32.totalorder %s178, %s181
      %p187 = scmp.eq.s32.totalorder %s16, 0
      %p188 = por %p186, %p187
      %p189 = scmp.ne.s32.totalorder %s178, %s181
      %p190 = scmp.eq.s32.totalorder %s21, 1
      %p191 = por %p189, %p190
      %p192 = scmp.ne.s32.totalorder %s181, %s182
      %p193 = scmp.eq.s32.totalorder %s21, 0
      %p194 = por %p192, %p193
      %p195 = scmp.ne.s32.totalorder %s181, %s182
      %p196 = scmp.eq.s32.totalorder %s22, 1
      %p197 = por %p195, %p196
      %p199 = scmp.ne.s32.totalorder %s182, %s198
      %p200 = scmp.eq.s32.totalorder %s22, 0
      %p201 = por %p199, %p200
      %p202 = scmp.le.s32.totalorder 1, %s16
      %p203 = scmp.lt.s32.totalorder %s16, 3
      %p204 = pnand %p202, %p203
      %p205 = pneg %p204
      // Predicated region
      $region9: #{tpu_custom_call.1} parent=5 // pred_check
        _
      $region10: #{tpu_custom_call.1} parent=5 // pred_check_branch
        %207 = sbr.rel (%p204) target = $region12
      $region11: #{tpu_custom_call.1} parent=5 // pred_region
        %s208 = ssub.s32 %s16, 1
        // Predicated region
        $region13: #{tpu_custom_call.1} parent=11 // pred_check
          %p209 = pneg %p63
        $region14: #{tpu_custom_call.1} parent=11 // pred_check_branch
          %211 = sbr.rel (%p209) target = $region16
        $region15: #{tpu_custom_call.1} parent=11 // pred_region
          _
        $region16: #{tpu_custom_call.1} parent=11 // pred_fallthru
          _
        // Predicated region
        $region17: #{tpu_custom_call.1} parent=11 // pred_check
          %p212 = pneg %p84
        $region18: #{tpu_custom_call.1} parent=11 // pred_check_branch
          %214 = sbr.rel (%p212) target = $region20
        $region19: #{tpu_custom_call.1} parent=11 // pred_region
          _
        $region20: #{tpu_custom_call.1} parent=11 // pred_fallthru
          _
        // Predicated region
        $region21: #{tpu_custom_call.1} parent=11 // pred_check
          %p215 = pneg %p105
        $region22: #{tpu_custom_call.1} parent=11 // pred_check_branch
          %217 = sbr.rel (%p215) target = $region24
        $region23: #{tpu_custom_call.1} parent=11 // pred_region
          _
        $region24: #{tpu_custom_call.1} parent=11 // pred_fallthru
          _
        // Predicated region
        $region25: #{tpu_custom_call.1} parent=11 // pred_check
          %p218 = pneg %p126
        $region26: #{tpu_custom_call.1} parent=11 // pred_check_branch
          %220 = sbr.rel (%p218) target = $region28
        $region27: #{tpu_custom_call.1} parent=11 // pred_region
          _
        $region28: #{tpu_custom_call.1} parent=11 // pred_fallthru
          _
        // Predicated region
        $region29: #{tpu_custom_call.1} parent=11 // pred_check
          %p221 = pneg %p147
        $region30: #{tpu_custom_call.1} parent=11 // pred_check_branch
          %223 = sbr.rel (%p221) target = $region32
        $region31: #{tpu_custom_call.1} parent=11 // pred_region
          _
        $region32: #{tpu_custom_call.1} parent=11 // pred_fallthru
          _
        // Predicated region
        $region33: #{tpu_custom_call.1} parent=11 // pred_check
          %p224 = pneg %p168
        $region34: #{tpu_custom_call.1} parent=11 // pred_check_branch
          %226 = sbr.rel (%p224) target = $region36
        $region35: #{tpu_custom_call.1} parent=11 // pred_region
          _
        $region36: #{tpu_custom_call.1} parent=11 // pred_fallthru
          _
      $region12: #{tpu_custom_call.1} parent=5 // pred_fallthru
        _
      %p227 = scmp.lt.s32.totalorder %s16, 2
      // Predicated region
      $region37: #{tpu_custom_call.1} parent=5 // pred_check
        %p228 = pneg %p227
      $region38: #{tpu_custom_call.1} parent=5 // pred_check_branch
        %230 = sbr.rel (%p228) target = $region40
      $region39: #{tpu_custom_call.1} parent=5 // pred_region
        // Predicated region
        $region41: #{tpu_custom_call.1} parent=39 // pred_check
          %p231 = pneg %p36
        $region42: #{tpu_custom_call.1} parent=39 // pred_check_branch
          %233 = sbr.rel (%p231) target = $region44
        $region43: #{tpu_custom_call.1} parent=39 // pred_region
          %p234 = scmp.lt.s32.totalorder %s16, 1
          %s235 = scalar_select %p234, %s16, 1
          %s236 = smul.addr %s235, 8
          %s237 = scalar_lea.vmem %s0, %s236
        $region44: #{tpu_custom_call.1} parent=39 // pred_fallthru
          _
      $region40: #{tpu_custom_call.1} parent=5 // pred_fallthru
        _
      %p238 = scmp.le.s32.totalorder 1, %s16
      %p239 = scmp.lt.s32.totalorder %s16, 3
      %p240 = pnand %p238, %p239
      %p241 = pneg %p240
      // Predicated region
      $region45: #{tpu_custom_call.1} parent=5 // pred_check
        _
      $region46: #{tpu_custom_call.1} parent=5 // pred_check_branch
        %243 = sbr.rel (%p240) target = $region48
      $region47: #{tpu_custom_call.1} parent=5 // pred_region
        %s244 = ssub.s32 %s16, 1
        %p245 = scmp.lt.s32.totalorder %s21, 1
        %s246 = scalar_select %p245, %s21, 1
        %s247 = smul.addr %s246, 8
        %s248 = scalar_lea.vmem %s0, %s247
        %p249 = pneg %p42
        %p250 = pneg %p39
        %p251 = pneg %p63
        %p252 = pneg %p60
        %p253 = pneg %p84
        %p254 = pneg %p81
        %p255 = pneg %p105
        %p256 = pneg %p102
        %p257 = pneg %p126
        %p258 = pneg %p123
        %p259 = pneg %p147
        %p260 = pneg %p144
        %p261 = pneg %p168
        %p262 = pneg %p165
        %p263 = pneg %p194
        %p264 = pneg %p191
        %s265 = sand.u32 %s181, 1
        %s266 = scalar_lea.sflag [#allocation3], %s265
        %s267 = sand.u32 %s181, 1
        %s268 = smul.addr %s267, 8
        %s269 = scalar_lea.vmem [#allocation2], %s268
        %p270 = scmp.lt.s32.totalorder %s21, 1
        %s271 = scalar_select %p270, %s21, 1
        %s272 = smul.addr %s271, 8
        %s273 = scalar_lea.vmem %s0, %s272
        %v275 = vld [vmem:[%s273] sm:$0xff]
        %v276 = vpack.c.bf16 %v275, %v275
        %v277 = vld [vmem:[%s1] sm:$0xf]
        %v278 = vld [vmem:[%s1 + $0x4] sm:$0xf]
        %v279 = vld [vmem:[%s1 + $0x8] sm:$0xf]
        %v280 = vld [vmem:[%s1 + $0xc] sm:$0xf]
        %v281 = vld [vmem:[%s2] sm:$0x1]
        %v283 = vlaneseq
        %v284 = vshrl.u32 %v283, 7
        %v285 = vsub.s32 0, %v284
        %v286 = vrot.slane %v281, %v285
        %v292 = vunpack.c.l.b16 %v277
        %v293 = vunpack.c.l.b16 %v278
        %v294 = vunpack.c.l.b16 %v279
        %v295 = vunpack.c.l.b16 %v280
        %v296 = vpack.c.b16 %v293, %v292
        %v297 = vpack.c.b16 %v295, %v294
        %vm300 = vcmask 261120
        %v302 = vsel %vm300, %v276, 0
        %304 = vmatprep.subr.bf16.mxu0 0
        %305 = vmatpush1.bf16.msra.mxu0 0
        %306 = vmatprep.subr.bf16.mxu0 0
        %307 = vmatpush1.bf16.msra.mxu0 0
        %308 = vmatprep.subr.bf16.mxu0 0
        %309 = vmatpush1.bf16.msra.mxu0 0
        %310 = vmatprep.subr.bf16.mxu0 0
        %311 = vmatpush1.bf16.msra.mxu0 0
        %312 = vmatprep.subr.bf16.mxu0 0
        %313 = vmatpush1.bf16.msra.mxu0 0
        %314 = vmatprep.subr.bf16.mxu0 0
        %315 = vmatpush1.bf16.msra.mxu0 0
        %316 = vmatprep.subr.bf16.mxu0 0
        %317 = vmatpush1.bf16.msra.mxu0 %v297
        %318 = vmatprep.subr.bf16.mxu0 0
        %319 = vmatpush1.bf16.msra.mxu0 %v296
        %320 = vmatprep.subr.bf16.mxu0 0
        %321 = vmatpush2.bf16.msra.mxu0 0
        %322 = vmatprep.subr.bf16.mxu0 0
        %323 = vmatpush2.bf16.msra.mxu0 0
        %324 = vmatprep.subr.bf16.mxu0 0
        %325 = vmatpush2.bf16.msra.mxu0 0
        %326 = vmatprep.subr.bf16.mxu0 0
        %327 = vmatpush2.bf16.msra.mxu0 0
        %328 = vmatprep.subr.bf16.mxu0 0
        %329 = vmatpush2.bf16.msra.mxu0 0
        %330 = vmatprep.subr.bf16.mxu0 0
        %331 = vmatpush2.bf16.msra.mxu0 0
        %332 = vmatprep.subr.bf16.mxu0 0
        %333 = vmatpush2.bf16.msra.mxu0 0
        %334 = vmatprep.subr.bf16.mxu0 0
        %335 = vmatpush2.bf16.msra.mxu0 0
        %336 = vmatprep.mubr.bf16.mxu0 0
        %337 = vmatmul.mubr.bf16.gmra.mxu0 %v302
        %v338 = vpop.f32.mrf.mxu0
        %v339 = vadd.f32 %v286, %v338
        %v340 = vpop.f32.mrf.mxu0
        %v341 = vpop.f32.mrf.mxu0
        %v342 = vpop.f32.mrf.mxu0
        %343 = vdwg.mxu0
        %v344 = vmax.f32 %v339, 0.0
        %v345 = vpack.c.bf16 %v344, %v344
        %v346 = vld [vmem:[%s3] sm:$0xf]
        %v347 = vld [vmem:[%s3 + $0x4] sm:$0xf]
        %v348 = vld [vmem:[%s3 + $0x8] sm:$0xf]
        %v349 = vld [vmem:[%s3 + $0xc] sm:$0xf]
        %v350 = vld [vmem:[%s3 + $0x10] sm:$0xf]
        %v351 = vld [vmem:[%s3 + $0x14] sm:$0xf]
        %v352 = vld [vmem:[%s3 + $0x18] sm:$0xf]
        %v353 = vld [vmem:[%s3 + $0x1c] sm:$0xf]
        %v354 = vld [vmem:[%s4] sm:$0x1]
        %v356 = vlaneseq
        %v357 = vshrl.u32 %v356, 7
        %v358 = vsub.s32 0, %v357
        %v359 = vrot.slane %v354, %v358
        %v369 = vunpack.c.l.b16 %v346
        %v370 = vunpack.c.l.b16 %v347
        %v371 = vunpack.c.l.b16 %v348
        %v372 = vunpack.c.l.b16 %v349
        %v373 = vunpack.c.l.b16 %v350
        %v374 = vunpack.c.l.b16 %v351
        %v375 = vunpack.c.l.b16 %v352
        %v376 = vunpack.c.l.b16 %v353
        %v377 = vpack.c.b16 %v370, %v369
        %v378 = vpack.c.b16 %v372, %v371
        %v379 = vpack.c.b16 %v374, %v373
        %v380 = vpack.c.b16 %v376, %v375
        %vm385 = vcmask 523264
        %v387 = vsel %vm385, %v345, 0
        %389 = vmatprep.subr.bf16.mxu0 0
        %390 = vmatpush1.bf16.msra.mxu0 0
        %391 = vmatprep.subr.bf16.mxu0 0
        %392 = vmatpush1.bf16.msra.mxu0 0
        %393 = vmatprep.subr.bf16.mxu0 0
        %394 = vmatpush1.bf16.msra.mxu0 0
        %395 = vmatprep.subr.bf16.mxu0 0
        %396 = vmatpush1.bf16.msra.mxu0 0
        %397 = vmatprep.subr.bf16.mxu0 0
        %398 = vmatpush1.bf16.msra.mxu0 %v380
        %399 = vmatprep.subr.bf16.mxu0 0
        %400 = vmatpush1.bf16.msra.mxu0 %v379
        %401 = vmatprep.subr.bf16.mxu0 0
        %402 = vmatpush1.bf16.msra.mxu0 %v378
        %403 = vmatprep.subr.bf16.mxu0 0
        %404 = vmatpush1.bf16.msra.mxu0 %v377
        %405 = vmatprep.subr.bf16.mxu0 0
        %406 = vmatpush2.bf16.msra.mxu0 0
        %407 = vmatprep.subr.bf16.mxu0 0
        %408 = vmatpush2.bf16.msra.mxu0 0
        %409 = vmatprep.subr.bf16.mxu0 0
        %410 = vmatpush2.bf16.msra.mxu0 0
        %411 = vmatprep.subr.bf16.mxu0 0
        %412 = vmatpush2.bf16.msra.mxu0 0
        %413 = vmatprep.subr.bf16.mxu0 0
        %414 = vmatpush2.bf16.msra.mxu0 0
        %415 = vmatprep.subr.bf16.mxu0 0
        %416 = vmatpush2.bf16.msra.mxu0 0
        %417 = vmatprep.subr.bf16.mxu0 0
        %418 = vmatpush2.bf16.msra.mxu0 0
        %419 = vmatprep.subr.bf16.mxu0 0
        %420 = vmatpush2.bf16.msra.mxu0 0
        %421 = vmatprep.mubr.bf16.mxu0 0
        %422 = vmatmul.mubr.bf16.gmra.mxu0 %v387
        %v423 = vpop.f32.mrf.mxu0
        %v424 = vadd.f32 %v359, %v423
        %v425 = vpop.f32.mrf.mxu0
        %v426 = vpop.f32.mrf.mxu0
        %v427 = vpop.f32.mrf.mxu0
        %428 = vdwg.mxu0
        %v429 = vadd.f32 %v275, %v424
        %v430 = vsel %vm300, %v429, 0.0
        %431 = vadd.xlane.f32.xlu0 %v430
        %v432 = vpop.xlane.xlu0 %431
        %v433 = vmul.f32 %v432, 0.03125
        %v434 = vsub.f32 %v429, %v433
        %v435 = vmul.f32 %v434, %v434
        %v436 = vsel %vm300, %v435, 0.0
        %437 = vadd.xlane.f32.xlu0 %v436
        %v438 = vpop.xlane.xlu0 %437
        %v439 = vmul.f32 %v438, 0.03125
        %v440 = vadd.f32 %v439, 1e-05
        %v441 = vrsqrt.pop %v440
        %v442 = vmul.f32 %v434, %v441
        %v443 = vld [vmem:[%s5] sm:$0x1]
        %v445 = vlaneseq
        %v446 = vshrl.u32 %v445, 7
        %v447 = vsub.s32 0, %v446
        %v448 = vrot.slane %v443, %v447
        %v450 = vmul.f32 %v442, %v448
        %v451 = vld [vmem:[%s6] sm:$0x1]
        %v453 = vlaneseq
        %v454 = vshrl.u32 %v453, 7
        %v455 = vsub.s32 0, %v454
        %v456 = vrot.slane %v451, %v455
        %v458 = vadd.f32 %v450, %v456
        %459 = vst.msk [vmem:[%s269] sm:$0xff] %vm300, %v458
        %s460 = sand.u32 %s181, 1
        %s461 = scalar_lea.sflag [#allocation3], %s460
        %s462 = sand.u32 %s181, 1
        %s463 = smul.addr %s462, 8
        %s464 = scalar_lea.vmem [#allocation2], %s463
        // Predicated region
        $region49: #{tpu_custom_call.1} parent=47 // pred_check
          %p465 = pneg %p191
        $region50: #{tpu_custom_call.1} parent=47 // pred_check_branch
          %467 = sbr.rel (%p465) target = $region52
        $region51: #{tpu_custom_call.1} parent=47 // pred_region
          %s469 = ssub.s32 128, 128
          %470 = vsyncadd %s461, %s469
          %s471 = smul.addr %s21, 128
          %s472 = scalar_lea.hbm %s7, %s471
          %s474 = sshll.u32 %s464, 4
          %s475 = int_to_ptr.vmem [resolvable:$true] %s474
          %477 = dma.vmem_to_hbm [thread:$0]  %s475, 128, %s472, %s461
        $region52: #{tpu_custom_call.1} parent=47 // pred_fallthru
          _
      $region48: #{tpu_custom_call.1} parent=5 // pred_fallthru
        _
      %p478 = scmp.le.s32.totalorder 2, %s16
      // Predicated region
      $region53: #{tpu_custom_call.1} parent=5 // pred_check
        %p479 = pneg %p478
      $region54: #{tpu_custom_call.1} parent=5 // pred_check_branch
        %481 = sbr.rel (%p479) target = $region56
      $region55: #{tpu_custom_call.1} parent=5 // pred_region
        %s482 = ssub.s32 %s16, 2
        // Predicated region
        $region57: #{tpu_custom_call.1} parent=55 // pred_check
          %p483 = pneg %p197
        $region58: #{tpu_custom_call.1} parent=55 // pred_check_branch
          %485 = sbr.rel (%p483) target = $region60
        $region59: #{tpu_custom_call.1} parent=55 // pred_region
          %s486 = sand.u32 %s182, 1
          %s487 = scalar_lea.sflag [#allocation3], %s486
          %s488 = sand.u32 %s182, 1
          %s489 = smul.addr %s488, 8
          %s490 = scalar_lea.vmem [#allocation2], %s489
          %491 = dma.done %s487, 128
        $region60: #{tpu_custom_call.1} parent=55 // pred_fallthru
          _
      $region56: #{tpu_custom_call.1} parent=5 // pred_fallthru
        _
    $region6: #{tpu_custom_call.1} parent=1 // loop_footer
      %s20 = sadd.s32 1, %s16
    $region7: #{tpu_custom_call.1} parent=1 // loop_footer_branch
      %15 = sbr.rel target = $region3
    $region8: #{tpu_custom_call.1} parent=1 // loop_exit
      _
    %492 = vsyncpa [#allocation3], 1
    %s493 = scalar_lea.sflag [#allocation3], 1
    %494 = vsyncpa %s493, 1

// kernel: tpu_custom_call.1
$region0: #{tpu_custom_call.1}
  #allocation0 [shape = 'u32[]', space=smem, size = 0x4, offset = 0x4, fixed_abs, tag = 'smem constant byte address 0x4 - core index']
  #allocation1 [shape = 'u32[144,128]{1,0:T(1,128)}', space=vmem, size = 0x12000, scoped, tag = 'internal scratch']
  %s0 = inlined_call_operand.vmem [shape: f32[16,32], index: 0, kind: input, shape index: {}]
  %s1 = inlined_call_operand.vmem [shape: bf16[32,64], index: 1, kind: input, shape index: {}]
  %s2 = inlined_call_operand.vmem [shape: f32[1,64], index: 2, kind: input, shape index: {}]
  %s3 = inlined_call_operand.vmem [shape: bf16[64,32], index: 3, kind: input, shape index: {}]
  %s4 = inlined_call_operand.vmem [shape: f32[1,32], index: 4, kind: input, shape index: {}]
  %s5 = inlined_call_operand.vmem [shape: f32[1,32], index: 5, kind: input, shape index: {}]
  %s6 = inlined_call_operand.vmem [shape: f32[1,32], index: 6, kind: input, shape index: {}]
  %s7 = inlined_call_operand.hbm [shape: f32[16,32], index: 7, kind: output, shape index: {}]
  %s8 = sld [smem:[#allocation0]]
  $region61: #{tpu_custom_call.1} parent=0
    _
  %s10 = ssub.s32 1, %s8
  %s11 = scalar_select 0, %s10, %s8
  $region1: #{tpu_custom_call.1} parent=0
    #allocation2 [shape = 'u8[8192]{0}', space=vmem, size = 0x2000, scoped, tag = 'output window, operand 0']
    #allocation3 [shape = 's32[2]{0}', space=sflag, size = 0x8, scoped, tag = 'scoped memory for tpu_custom_call.1']
    %12 = vsyncpa [#allocation3], 0
    %s13 = scalar_lea.sflag [#allocation3], 1
    %14 = vsyncpa %s13, 0
    loop: start=0, step=1, limit=4
    $region2: #{tpu_custom_call.1} parent=1 // loop_pre_header
      _
    $region3: #{tpu_custom_call.1} parent=1 // loop_header
      %s16 = sphi 0, %s20
      %p17 = scmp.ge.s32.totalorder %s16, 4
      %s26 = sphi 0, %s28
      %s29 = sphi 0, %s26
      %s30 = sphi 0, %s29
      %s46 = sphi 0, %s30
      %s50 = sphi 0, %s50
      %s52 = sphi 0, %s50
      %s53 = sphi 0, %s52
      %s67 = sphi 0, %s53
      %s71 = sphi 0, %s71
      %s73 = sphi 0, %s71
      %s74 = sphi 0, %s73
      %s88 = sphi 0, %s74
      %s92 = sphi 0, %s92
      %s94 = sphi 0, %s92
      %s95 = sphi 0, %s94
      %s109 = sphi 0, %s95
      %s113 = sphi 0, %s113
      %s115 = sphi 0, %s113
      %s116 = sphi 0, %s115
      %s130 = sphi 0, %s116
      %s134 = sphi 0, %s134
      %s136 = sphi 0, %s134
      %s137 = sphi 0, %s136
      %s151 = sphi 0, %s137
      %s155 = sphi 0, %s155
      %s157 = sphi 0, %s155
      %s158 = sphi 0, %s157
      %s172 = sphi 0, %s158
      %s178 = sphi 0, %s180
      %s181 = sphi 0, %s178
      %s182 = sphi 0, %s181
      %s198 = sphi 0, %s182
    $region4: #{tpu_custom_call.1} parent=1 // loop_header_branch
      %19 = sbr.rel (%p17) target = $region8
    $region5: #{tpu_custom_call.1} parent=1 // loop_body
      %s21 = ssub.s32 %s16, 1
      %s22 = ssub.s32 %s16, 2
      %s23 = sadd.s32 %s16, 1
      %s24 = ssub.s32 %s16, %s23
      %p25 = scmp.eq.s32.totalorder %s24, 0
      %s27 = sadd.s32 %s26, 1
      %s28 = scalar_select %p25, %s26, %s27
      %p31 = pneg %p25
      %p32 = scmp.eq.s32.totalorder %s16, 1
      %p33 = por %p31, %p32
      %p34 = scmp.ne.s32.totalorder %s26, %s29
      %p35 = scmp.eq.s32.totalorder %s16, 0
      %p36 = por %p34, %p35
      %p37 = scmp.ne.s32.totalorder %s26, %s29
      %p38 = scmp.eq.s32.totalorder %s21, 1
      %p39 = por %p37, %p38
      %p40 = scmp.ne.s32.totalorder %s29, %s30
      %p41 = scmp.eq.s32.totalorder %s21, 0
      %p42 = por %p40, %p41
      %p43 = scmp.ne.s32.totalorder %s29, %s30
      %p44 = scmp.eq.s32.totalorder %s22, 1
      %p45 = por %p43, %p44
      %p47 = scmp.ne.s32.totalorder %s30, %s46
      %p48 = scmp.eq.s32.totalorder %s22, 0
      %p49 = por %p47, %p48
      %s51 = sadd.s32 %s50, 1
      %p54 = scmp.eq.s32.totalorder %s16, 1
      %p55 = scmp.ne.s32.totalorder %s50, %s52
      %p56 = scmp.eq.s32.totalorder %s16, 0
      %p57 = por %p55, %p56
      %p58 = scmp.ne.s32.totalorder %s50, %s52
      %p59 = scmp.eq.s32.totalorder %s21, 1
      %p60 = por %p58, %p59
      %p61 = scmp.ne.s32.totalorder %s52, %s53
      %p62 = scmp.eq.s32.totalorder %s21, 0
      %p63 = por %p61, %p62
      %p64 = scmp.ne.s32.totalorder %s52, %s53
      %p65 = scmp.eq.s32.totalorder %s22, 1
      %p66 = por %p64, %p65
      %p68 = scmp.ne.s32.totalorder %s53, %s67
      %p69 = scmp.eq.s32.totalorder %s22, 0
      %p70 = por %p68, %p69
      %s72 = sadd.s32 %s71, 1
      %p75 = scmp.eq.s32.totalorder %s16, 1
      %p76 = scmp.ne.s32.totalorder %s71, %s73
      %p77 = scmp.eq.s32.totalorder %s16, 0
      %p78 = por %p76, %p77
      %p79 = scmp.ne.s32.totalorder %s71, %s73
      %p80 = scmp.eq.s32.totalorder %s21, 1
      %p81 = por %p79, %p80
      %p82 = scmp.ne.s32.totalorder %s73, %s74
      %p83 = scmp.eq.s32.totalorder %s21, 0
      %p84 = por %p82, %p83
      %p85 = scmp.ne.s32.totalorder %s73, %s74
      %p86 = scmp.eq.s32.totalorder %s22, 1
      %p87 = por %p85, %p86
      %p89 = scmp.ne.s32.totalorder %s74, %s88
      %p90 = scmp.eq.s32.totalorder %s22, 0
      %p91 = por %p89, %p90
      %s93 = sadd.s32 %s92, 1
      %p96 = scmp.eq.s32.totalorder %s16, 1
      %p97 = scmp.ne.s32.totalorder %s92, %s94
      %p98 = scmp.eq.s32.totalorder %s16, 0
      %p99 = por %p97, %p98
      %p100 = scmp.ne.s32.totalorder %s92, %s94
      %p101 = scmp.eq.s32.totalorder %s21, 1
      %p102 = por %p100, %p101
      %p103 = scmp.ne.s32.totalorder %s94, %s95
      %p104 = scmp.eq.s32.totalorder %s21, 0
      %p105 = por %p103, %p104
      %p106 = scmp.ne.s32.totalorder %s94, %s95
      %p107 = scmp.eq.s32.totalorder %s22, 1
      %p108 = por %p106, %p107
      %p110 = scmp.ne.s32.totalorder %s95, %s109
      %p111 = scmp.eq.s32.totalorder %s22, 0
      %p112 = por %p110, %p111
      %s114 = sadd.s32 %s113, 1
      %p117 = scmp.eq.s32.totalorder %s16, 1
      %p118 = scmp.ne.s32.totalorder %s113, %s115
      %p119 = scmp.eq.s32.totalorder %s16, 0
      %p120 = por %p118, %p119
      %p121 = scmp.ne.s32.totalorder %s113, %s115
      %p122 = scmp.eq.s32.totalorder %s21, 1
      %p123 = por %p121, %p122
      %p124 = scmp.ne.s32.totalorder %s115, %s116
      %p125 = scmp.eq.s32.totalorder %s21, 0
      %p126 = por %p124, %p125
      %p127 = scmp.ne.s32.totalorder %s115, %s116
      %p128 = scmp.eq.s32.totalorder %s22, 1
      %p129 = por %p127, %p128
      %p131 = scmp.ne.s32.totalorder %s116, %s130
      %p132 = scmp.eq.s32.totalorder %s22, 0
      %p133 = por %p131, %p132
      %s135 = sadd.s32 %s134, 1
      %p138 = scmp.eq.s32.totalorder %s16, 1
      %p139 = scmp.ne.s32.totalorder %s134, %s136
      %p140 = scmp.eq.s32.totalorder %s16, 0
      %p141 = por %p139, %p140
      %p142 = scmp.ne.s32.totalorder %s134, %s136
      %p143 = scmp.eq.s32.totalorder %s21, 1
      %p144 = por %p142, %p143
      %p145 = scmp.ne.s32.totalorder %s136, %s137
      %p146 = scmp.eq.s32.totalorder %s21, 0
      %p147 = por %p145, %p146
      %p148 = scmp.ne.s32.totalorder %s136, %s137
      %p149 = scmp.eq.s32.totalorder %s22, 1
      %p150 = por %p148, %p149
      %p152 = scmp.ne.s32.totalorder %s137, %s151
      %p153 = scmp.eq.s32.totalorder %s22, 0
      %p154 = por %p152, %p153
      %s156 = sadd.s32 %s155, 1
      %p159 = scmp.eq.s32.totalorder %s16, 1
      %p160 = scmp.ne.s32.totalorder %s155, %s157
      %p161 = scmp.eq.s32.totalorder %s16, 0
      %p162 = por %p160, %p161
      %p163 = scmp.ne.s32.totalorder %s155, %s157
      %p164 = scmp.eq.s32.totalorder %s21, 1
      %p165 = por %p163, %p164
      %p166 = scmp.ne.s32.totalorder %s157, %s158
      %p167 = scmp.eq.s32.totalorder %s21, 0
      %p168 = por %p166, %p167
      %p169 = scmp.ne.s32.totalorder %s157, %s158
      %p170 = scmp.eq.s32.totalorder %s22, 1
      %p171 = por %p169, %p170
      %p173 = scmp.ne.s32.totalorder %s158, %s172
      %p174 = scmp.eq.s32.totalorder %s22, 0
      %p175 = por %p173, %p174
      %s176 = ssub.s32 %s16, %s23
      %p177 = scmp.eq.s32.totalorder %s176, 0
      %s179 = sadd.s32 %s178, 1
      %s180 = scalar_select %p177, %s178, %s179
      %p183 = pneg %p177
      %p184 = scmp.eq.s32.totalorder %s16, 1
      %p185 = por %p183, %p184
      %p186 = scmp.ne.s32.totalorder %s178, %s181
      %p187 = scmp.eq.s32.totalorder %s16, 0
      %p188 = por %p186, %p187
      %p189 = scmp.ne.s32.totalorder %s178, %s181
      %p190 = scmp.eq.s32.totalorder %s21, 1
      %p191 = por %p189, %p190
      %p192 = scmp.ne.s32.totalorder %s181, %s182
      %p193 = scmp.eq.s32.totalorder %s21, 0
      %p194 = por %p192, %p193
      %p195 = scmp.ne.s32.totalorder %s181, %s182
      %p196 = scmp.eq.s32.totalorder %s22, 1
      %p197 = por %p195, %p196
      %p199 = scmp.ne.s32.totalorder %s182, %s198
      %p200 = scmp.eq.s32.totalorder %s22, 0
      %p201 = por %p199, %p200
      %p202 = scmp.le.s32.totalorder 1, %s16
      %p203 = scmp.lt.s32.totalorder %s16, 3
      %p204 = pnand %p202, %p203
      %p205 = pneg %p204
      // Predicated region
      $region9: #{tpu_custom_call.1} parent=5 // pred_check
        _
      $region10: #{tpu_custom_call.1} parent=5 // pred_check_branch
        %207 = sbr.rel (%p204) target = $region12
      $region11: #{tpu_custom_call.1} parent=5 // pred_region
        %s208 = ssub.s32 %s16, 1
        // Predicated region
        $region13: #{tpu_custom_call.1} parent=11 // pred_check
          %p209 = pneg %p63
        $region14: #{tpu_custom_call.1} parent=11 // pred_check_branch
          %211 = sbr.rel (%p209) target = $region16
        $region15: #{tpu_custom_call.1} parent=11 // pred_region
          _
        $region16: #{tpu_custom_call.1} parent=11 // pred_fallthru
          _
        // Predicated region
        $region17: #{tpu_custom_call.1} parent=11 // pred_check
          %p212 = pneg %p84
        $region18: #{tpu_custom_call.1} parent=11 // pred_check_branch
          %214 = sbr.rel (%p212) target = $region20
        $region19: #{tpu_custom_call.1} parent=11 // pred_region
          _
        $region20: #{tpu_custom_call.1} parent=11 // pred_fallthru
          _
        // Predicated region
        $region21: #{tpu_custom_call.1} parent=11 // pred_check
          %p215 = pneg %p105
        $region22: #{tpu_custom_call.1} parent=11 // pred_check_branch
          %217 = sbr.rel (%p215) target = $region24
        $region23: #{tpu_custom_call.1} parent=11 // pred_region
          _
        $region24: #{tpu_custom_call.1} parent=11 // pred_fallthru
          _
        // Predicated region
        $region25: #{tpu_custom_call.1} parent=11 // pred_check
          %p218 = pneg %p126
        $region26: #{tpu_custom_call.1} parent=11 // pred_check_branch
          %220 = sbr.rel (%p218) target = $region28
        $region27: #{tpu_custom_call.1} parent=11 // pred_region
          _
        $region28: #{tpu_custom_call.1} parent=11 // pred_fallthru
          _
        // Predicated region
        $region29: #{tpu_custom_call.1} parent=11 // pred_check
          %p221 = pneg %p147
        $region30: #{tpu_custom_call.1} parent=11 // pred_check_branch
          %223 = sbr.rel (%p221) target = $region32
        $region31: #{tpu_custom_call.1} parent=11 // pred_region
          _
        $region32: #{tpu_custom_call.1} parent=11 // pred_fallthru
          _
        // Predicated region
        $region33: #{tpu_custom_call.1} parent=11 // pred_check
          %p224 = pneg %p168
        $region34: #{tpu_custom_call.1} parent=11 // pred_check_branch
          %226 = sbr.rel (%p224) target = $region36
        $region35: #{tpu_custom_call.1} parent=11 // pred_region
          _
        $region36: #{tpu_custom_call.1} parent=11 // pred_fallthru
          _
      $region12: #{tpu_custom_call.1} parent=5 // pred_fallthru
        _
      %p227 = scmp.lt.s32.totalorder %s16, 2
      // Predicated region
      $region37: #{tpu_custom_call.1} parent=5 // pred_check
        %p228 = pneg %p227
      $region38: #{tpu_custom_call.1} parent=5 // pred_check_branch
        %230 = sbr.rel (%p228) target = $region40
      $region39: #{tpu_custom_call.1} parent=5 // pred_region
        // Predicated region
        $region41: #{tpu_custom_call.1} parent=39 // pred_check
          %p231 = pneg %p36
        $region42: #{tpu_custom_call.1} parent=39 // pred_check_branch
          %233 = sbr.rel (%p231) target = $region44
        $region43: #{tpu_custom_call.1} parent=39 // pred_region
          %p234 = scmp.lt.s32.totalorder %s16, 1
          %s235 = scalar_select %p234, %s16, 1
          %s236 = smul.addr %s235, 8
          %s237 = scalar_lea.vmem %s0, %s236
        $region44: #{tpu_custom_call.1} parent=39 // pred_fallthru
          _
      $region40: #{tpu_custom_call.1} parent=5 // pred_fallthru
        _
      %p238 = scmp.le.s32.totalorder 1, %s16
      %p239 = scmp.lt.s32.totalorder %s16, 3
      %p240 = pnand %p238, %p239
      %p241 = pneg %p240
      // Predicated region
      $region45: #{tpu_custom_call.1} parent=5 // pred_check
        _
      $region46: #{tpu_custom_call.1} parent=5 // pred_check_branch
        %243 = sbr.rel (%p240) target = $region48
      $region47: #{tpu_custom_call.1} parent=5 // pred_region
        %s244 = ssub.s32 %s16, 1
        %p245 = scmp.lt.s32.totalorder %s21, 1
        %s246 = scalar_select %p245, %s21, 1
        %s247 = smul.addr %s246, 8
        %s248 = scalar_lea.vmem %s0, %s247
        %p249 = pneg %p42
        %p250 = pneg %p39
        %p251 = pneg %p63
        %p252 = pneg %p60
        %p253 = pneg %p84
        %p254 = pneg %p81
        %p255 = pneg %p105
        %p256 = pneg %p102
        %p257 = pneg %p126
        %p258 = pneg %p123
        %p259 = pneg %p147
        %p260 = pneg %p144
        %p261 = pneg %p168
        %p262 = pneg %p165
        %p263 = pneg %p194
        %p264 = pneg %p191
        %s265 = sand.u32 %s181, 1
        %s266 = scalar_lea.sflag [#allocation3], %s265
        %s267 = sand.u32 %s181, 1
        %s268 = smul.addr %s267, 8
        %s269 = scalar_lea.vmem [#allocation2], %s268
        %p270 = scmp.lt.s32.totalorder %s21, 1
        %s271 = scalar_select %p270, %s21, 1
        %s272 = smul.addr %s271, 8
        %s273 = scalar_lea.vmem %s0, %s272
        %v275 = vld [vmem:[%s273] sm:$0xff]
        %v276 = vpack.c.bf16 %v275, %v275
        %v277 = vld [vmem:[%s1] sm:$0xf]
        %v278 = vld [vmem:[%s1 + $0x4] sm:$0xf]
        %v279 = vld [vmem:[%s1 + $0x8] sm:$0xf]
        %v280 = vld [vmem:[%s1 + $0xc] sm:$0xf]
        %v281 = vld [vmem:[%s2] sm:$0x1]
        %v283 = vlaneseq
        %v284 = vshrl.u32 %v283, 7
        %v285 = vsub.s32 0, %v284
        %v286 = vrot.slane %v281, %v285
        %v292 = vunpack.c.l.b16 %v277
        %v293 = vunpack.c.l.b16 %v278
        %v294 = vunpack.c.l.b16 %v279
        %v295 = vunpack.c.l.b16 %v280
        %v296 = vpack.c.b16 %v293, %v292
        %v297 = vpack.c.b16 %v295, %v294
        %vm300 = vcmask 261120
        %v302 = vsel %vm300, %v276, 0
        %304 = vmatprep.subr.bf16.mxu0 0
        %305 = vmatpush1.bf16.msra.mxu0 0
        %306 = vmatprep.subr.bf16.mxu0 0
        %307 = vmatpush1.bf16.msra.mxu0 0
        %308 = vmatprep.subr.bf16.mxu0 0
        %309 = vmatpush1.bf16.msra.mxu0 0
        %310 = vmatprep.subr.bf16.mxu0 0
        %311 = vmatpush1.bf16.msra.mxu0 0
        %312 = vmatprep.subr.bf16.mxu0 0
        %313 = vmatpush1.bf16.msra.mxu0 0
        %314 = vmatprep.subr.bf16.mxu0 0
        %315 = vmatpush1.bf16.msra.mxu0 0
        %316 = vmatprep.subr.bf16.mxu0 0
        %317 = vmatpush1.bf16.msra.mxu0 %v297
        %318 = vmatprep.subr.bf16.mxu0 0
        %319 = vmatpush1.bf16.msra.mxu0 %v296
        %320 = vmatprep.subr.bf16.mxu0 0
        %321 = vmatpush2.bf16.msra.mxu0 0
        %322 = vmatprep.subr.bf16.mxu0 0
        %323 = vmatpush2.bf16.msra.mxu0 0
        %324 = vmatprep.subr.bf16.mxu0 0
        %325 = vmatpush2.bf16.msra.mxu0 0
        %326 = vmatprep.subr.bf16.mxu0 0
        %327 = vmatpush2.bf16.msra.mxu0 0
        %328 = vmatprep.subr.bf16.mxu0 0
        %329 = vmatpush2.bf16.msra.mxu0 0
        %330 = vmatprep.subr.bf16.mxu0 0
        %331 = vmatpush2.bf16.msra.mxu0 0
        %332 = vmatprep.subr.bf16.mxu0 0
        %333 = vmatpush2.bf16.msra.mxu0 0
        %334 = vmatprep.subr.bf16.mxu0 0
        %335 = vmatpush2.bf16.msra.mxu0 0
        %336 = vmatprep.mubr.bf16.mxu0 0
        %337 = vmatmul.mubr.bf16.gmra.mxu0 %v302
        %v338 = vpop.f32.mrf.mxu0
        %v339 = vadd.f32 %v286, %v338
        %v340 = vpop.f32.mrf.mxu0
        %v341 = vpop.f32.mrf.mxu0
        %v342 = vpop.f32.mrf.mxu0
        %343 = vdwg.mxu0
        %v344 = vmax.f32 %v339, 0.0
        %v345 = vpack.c.bf16 %v344, %v344
        %v346 = vld [vmem:[%s3] sm:$0xf]
        %v347 = vld [vmem:[%s3 + $0x4] sm:$0xf]
        %v348 = vld [vmem:[%s3 + $0x8] sm:$0xf]
        %v349 = vld [vmem:[%s3 + $0xc] sm:$0xf]
        %v350 = vld [vmem:[%s3 + $0x10] sm:$0xf]
        %v351 = vld [vmem:[%s3 + $0x14] sm:$0xf]
        %v352 = vld [vmem:[%s3 + $0x18] sm:$0xf]
        %v353 = vld [vmem:[%s3 + $0x1c] sm:$0xf]
        %v354 = vld [vmem:[%s4] sm:$0x1]
        %v356 = vlaneseq
        %v357 = vshrl.u32 %v356, 7
        %v358 = vsub.s32 0, %v357
        %v359 = vrot.slane %v354, %v358
        %v369 = vunpack.c.l.b16 %v346
        %v370 = vunpack.c.l.b16 %v347
        %v371 = vunpack.c.l.b16 %v348
        %v372 = vunpack.c.l.b16 %v349
        %v373 = vunpack.c.l.b16 %v350
        %v374 = vunpack.c.l.b16 %v351
        %v375 = vunpack.c.l.b16 %v352
        %v376 = vunpack.c.l.b16 %v353
        %v377 = vpack.c.b16 %v370, %v369
        %v378 = vpack.c.b16 %v372, %v371
        %v379 = vpack.c.b16 %v374, %v373
        %v380 = vpack.c.b16 %v376, %v375
        %vm385 = vcmask 523264
        %v387 = vsel %vm385, %v345, 0
        %389 = vmatprep.subr.bf16.mxu0 0
        %390 = vmatpush1.bf16.msra.mxu0 0
        %391 = vmatprep.subr.bf16.mxu0 0
        %392 = vmatpush1.bf16.msra.mxu0 0
        %393 = vmatprep.subr.bf16.mxu0 0
        %394 = vmatpush1.bf16.msra.mxu0 0
        %395 = vmatprep.subr.bf16.mxu0 0
        %396 = vmatpush1.bf16.msra.mxu0 0
        %397 = vmatprep.subr.bf16.mxu0 0
        %398 = vmatpush1.bf16.msra.mxu0 %v380
        %399 = vmatprep.subr.bf16.mxu0 0
        %400 = vmatpush1.bf16.msra.mxu0 %v379
        %401 = vmatprep.subr.bf16.mxu0 0
        %402 = vmatpush1.bf16.msra.mxu0 %v378
        %403 = vmatprep.subr.bf16.mxu0 0
        %404 = vmatpush1.bf16.msra.mxu0 %v377
        %405 = vmatprep.subr.bf16.mxu0 0
        %406 = vmatpush2.bf16.msra.mxu0 0
        %407 = vmatprep.subr.bf16.mxu0 0
        %408 = vmatpush2.bf16.msra.mxu0 0
        %409 = vmatprep.subr.bf16.mxu0 0
        %410 = vmatpush2.bf16.msra.mxu0 0
        %411 = vmatprep.subr.bf16.mxu0 0
        %412 = vmatpush2.bf16.msra.mxu0 0
        %413 = vmatprep.subr.bf16.mxu0 0
        %414 = vmatpush2.bf16.msra.mxu0 0
        %415 = vmatprep.subr.bf16.mxu0 0
        %416 = vmatpush2.bf16.msra.mxu0 0
        %417 = vmatprep.subr.bf16.mxu0 0
        %418 = vmatpush2.bf16.msra.mxu0 0
        %419 = vmatprep.subr.bf16.mxu0 0
        %420 = vmatpush2.bf16.msra.mxu0 0
        %421 = vmatprep.mubr.bf16.mxu0 0
        %422 = vmatmul.mubr.bf16.gmra.mxu0 %v387
        %v423 = vpop.f32.mrf.mxu0
        %v424 = vadd.f32 %v359, %v423
        %v425 = vpop.f32.mrf.mxu0
        %v426 = vpop.f32.mrf.mxu0
        %v427 = vpop.f32.mrf.mxu0
        %428 = vdwg.mxu0
        %v429 = vadd.f32 %v275, %v424
        %v430 = vsel %vm300, %v429, 0.0
        %431 = vadd.xlane.f32.xlu0 %v430
        %v432 = vpop.xlane.xlu0 %431
        %v433 = vmul.f32 %v432, 0.03125
        %v434 = vsub.f32 %v429, %v433
        %v435 = vmul.f32 %v434, %v434
        %v436 = vsel %vm300, %v435, 0.0
        %437 = vadd.xlane.f32.xlu0 %v436
        %v438 = vpop.xlane.xlu0 %437
        %v439 = vmul.f32 %v438, 0.03125
        %v440 = vadd.f32 %v439, 1e-05
        %v441 = vrsqrt.pop %v440
        %v442 = vmul.f32 %v434, %v441
        %v443 = vld [vmem:[%s5] sm:$0x1]
        %v445 = vlaneseq
        %v446 = vshrl.u32 %v445, 7
        %v447 = vsub.s32 0, %v446
        %v448 = vrot.slane %v443, %v447
        %v450 = vmul.f32 %v442, %v448
        %v451 = vld [vmem:[%s6] sm:$0x1]
        %v453 = vlaneseq
        %v454 = vshrl.u32 %v453, 7
        %v455 = vsub.s32 0, %v454
        %v456 = vrot.slane %v451, %v455
        %v458 = vadd.f32 %v450, %v456
        %459 = vst.msk [vmem:[%s269] sm:$0xff] %vm300, %v458
        %s460 = sand.u32 %s181, 1
        %s461 = scalar_lea.sflag [#allocation3], %s460
        %s462 = sand.u32 %s181, 1
        %s463 = smul.addr %s462, 8
        %s464 = scalar_lea.vmem [#allocation2], %s463
        // Predicated region
        $region49: #{tpu_custom_call.1} parent=47 // pred_check
          %p465 = pneg %p191
        $region50: #{tpu_custom_call.1} parent=47 // pred_check_branch
          %467 = sbr.rel (%p465) target = $region52
        $region51: #{tpu_custom_call.1} parent=47 // pred_region
          %s469 = ssub.s32 128, 128
          %470 = vsyncadd %s461, %s469
          %s471 = smul.addr %s21, 128
          %s472 = scalar_lea.hbm %s7, %s471
          %s474 = sshll.u32 %s464, 4
          %s475 = int_to_ptr.vmem [resolvable:$true] %s474
          %477 = dma.vmem_to_hbm [thread:$0]  %s475, 128, %s472, %s461
        $region52: #{tpu_custom_call.1} parent=47 // pred_fallthru
          _
      $region48: #{tpu_custom_call.1} parent=5 // pred_fallthru
        _
      %p478 = scmp.le.s32.totalorder 2, %s16
      // Predicated region
      $region53: #{tpu_custom_call.1} parent=5 // pred_check
        %p479 = pneg %p478
      $region54: #{tpu_custom_call.1} parent=5 // pred_check_branch
        %481 = sbr.rel (%p479) target = $region56
      $region55: #{tpu_custom_call.1} parent=5 // pred_region
        %s482 = ssub.s32 %s16, 2
        // Predicated region
        $region57: #{tpu_custom_call.1} parent=55 // pred_check
          %p483 = pneg %p197
        $region58: #{tpu_custom_call.1} parent=55 // pred_check_branch
          %485 = sbr.rel (%p483) target = $region60
        $region59: #{tpu_custom_call.1} parent=55 // pred_region
          %s486 = sand.u32 %s182, 1
          %s487 = scalar_lea.sflag [#allocation3], %s486
          %s488 = sand.u32 %s182, 1
          %s489 = smul.addr %s488, 8
          %s490 = scalar_lea.vmem [#allocation2], %s489
          %491 = dma.done %s487, 128
        $region60: #{tpu_custom_call.1} parent=55 // pred_fallthru
          _
      $region56: #{tpu_custom_call.1} parent=5 // pred_fallthru
        _
    $region6: #{tpu_custom_call.1} parent=1 // loop_footer
      %s20 = sadd.s32 1, %s16
    $region7: #{tpu_custom_call.1} parent=1 // loop_footer_branch
      %15 = sbr.rel target = $region3
    $region8: #{tpu_custom_call.1} parent=1 // loop_exit
      _
    %492 = vsyncpa [#allocation3], 1
    %s493 = scalar_lea.sflag [#allocation3], 1
    %494 = vsyncpa %s493, 1

</llo_original>
